<compile_context>
chip_gen: v7x
topology: tpu7x:2x2x1
jax: 0.10.0
libtpu: 0.0.40
codegen_flags: <defaults>
</compile_context>

<pallas_src>
import functools
import math

import jax
import jax.numpy as jnp
import numpy as np
from jax.experimental import pallas as pl
from jax.experimental.pallas import tpu as pltpu

EPS = 1e-5
LANE = 128

_VMEM = functools.partial(pl.BlockSpec, memory_space=pltpu.MemorySpace.VMEM)


def _round_up(x, m):
    return (x + m - 1) // m * m


_CPARAMS_CACHE = None


def _cparams():
    """Per-chip VMEM scoped limit: ~40 MiB on 64-MiB-VMEM parts (v7x), 64 MiB else."""
    global _CPARAMS_CACHE
    if _CPARAMS_CACHE is None:
        phys = 128 * 1024 * 1024
        try:
            phys = int(getattr(pltpu.get_tpu_info(), "vmem_capacity_bytes", phys))
        except Exception:
            pass
        limit = (40 if phys <= 64 * 1024 * 1024 else 64) * 1024 * 1024
        _CPARAMS_CACHE = pltpu.CompilerParams(vmem_limit_bytes=limit)
    return _CPARAMS_CACHE


# ------------------------------ in-kernel helpers --------------------------- #

def _bn_train(y, g, b, col, inv_m):
    """Training-mode BatchNorm (biased variance) over columns of a (C, M) slab.

    `col` is the (1, M) column-validity mask (1 for real columns, 0 for lane padding).
    Conv outputs are exactly 0 at padded columns so the mean is exact; masking the
    centered values keeps the (numerically stabler) centered sum-of-squares exact too.
    inv_m = 1 / M_true."""
    mean = jnp.sum(y, axis=1, keepdims=True) * inv_m
    yc = (y - mean) * col
    var = jnp.sum(yc * yc, axis=1, keepdims=True) * inv_m
    return yc * jax.lax.rsqrt(var + EPS) * g + b


def _conv3x3_concat(src_f32, w_ref, mask_ref, patch_ref, shifts):
    """3x3 / stride-1 / pad-1 conv on a (Cin, M) f32 slab.

    The source is cast to bf16 once; the 9 lane-rolled, tap-masked copies are packed
    into the (9*Cin, M) bf16 `patch_ref` scratch and consumed by ONE K=9*Cin MXU
    matmul.  mask_ref: (9, 1, M) bf16 {0,1} tap-validity masks."""
    cin = src_f32.shape[0]
    s = src_f32.astype(jnp.bfloat16)
    for k in range(9):
        sh = s if shifts[k] == 0 else pltpu.roll(s, shifts[k], axis=1)
        # TODO(synk): on v5e (no native bf16 VALU) a select-based mask may be cheaper.
        patch_ref[k * cin:(k + 1) * cin, :] = sh * mask_ref[k]
    return jnp.dot(w_ref[...], patch_ref[...], preferred_element_type=jnp.float32)


# ---------------------------------- kernels --------------------------------- #

def _stem_kernel(a_ref, w_ref, g_ref, b_ref, mask_ref, o_ref, *, shifts, inv_m):
    """7x7/s2 conv (pre-im2col'd) + BN + ReLU + fused 3x3 stride-1 max-pool.

    The stride-2 column selection of the max-pool is done outside (a cheap slice).
    Post-ReLU values are >= 0, so invalid window taps contribute 0 via the mask
    multiply, which matches torch's implicit -inf max-pool padding."""
    col = mask_ref[4].astype(jnp.float32)        # center tap == column-validity mask
    y = jnp.dot(w_ref[...], a_ref[...], preferred_element_type=jnp.float32)
    y = jnp.maximum(_bn_train(y, g_ref[...], b_ref[...], col, inv_m), 0.0)
    out = y * col
    for k in range(9):
        if k == 4:
            continue
        cand = y if shifts[k] == 0 else pltpu.roll(y, shifts[k], axis=1)
        out = jnp.maximum(out, cand * mask_ref[k].astype(jnp.float32))
    o_ref[...] = out


def _stage_kernel(x_ref, wA1, gA1, bA1, wA2, gA2, bA2,
                  wB1, gB1, bB1, wB2, gB2, bB2, mask_ref, o_ref, patch_ref,
                  *, shifts, inv_m):
    """Two fused stride-1 BasicBlocks (stage 1): 4 in-kernel 3x3 convs."""
    col = mask_ref[4].astype(jnp.float32)
    x = x_ref[...]
    y = _conv3x3_concat(x, wA1, mask_ref, patch_ref, shifts)
    y = jnp.maximum(_bn_train(y, gA1[...], bA1[...], col, inv_m), 0.0)
    y = _conv3x3_concat(y, wA2, mask_ref, patch_ref, shifts)
    x2 = jnp.maximum(_bn_train(y, gA2[...], bA2[...], col, inv_m) + x, 0.0)
    y = _conv3x3_concat(x2, wB1, mask_ref, patch_ref, shifts)
    y = jnp.maximum(_bn_train(y, gB1[...], bB1[...], col, inv_m), 0.0)
    y = _conv3x3_concat(y, wB2, mask_ref, patch_ref, shifts)
    o_ref[...] = jnp.maximum(_bn_train(y, gB2[...], bB2[...], col, inv_m) + x2, 0.0)


def _stage_down_kernel(a1_ref, ad_ref, wA1, gA1, bA1, wA2, gA2, bA2,
                       wd, gd, bd, wB1, gB1, bB1, wB2, gB2, bB2,
                       mask_ref, o_ref, patch_ref, *, shifts, inv_m):
    """Fused stage 2/3/4: stride-2 BasicBlock (with 1x1 downsample) + stride-1 block."""
    col = mask_ref[4].astype(jnp.float32)
    y = jnp.dot(wA1[...], a1_ref[...], preferred_element_type=jnp.float32)
    y = jnp.maximum(_bn_train(y, gA1[...], bA1[...], col, inv_m), 0.0)
    y = _conv3x3_concat(y, wA2, mask_ref, patch_ref, shifts)
    r = jnp.dot(wd[...], ad_ref[...], preferred_element_type=jnp.float32)
    r = _bn_train(r, gd[...], bd[...], col, inv_m)
    x2 = jnp.maximum(_bn_train(y, gA2[...], bA2[...], col, inv_m) + r, 0.0)
    y = _conv3x3_concat(x2, wB1, mask_ref, patch_ref, shifts)
    y = jnp.maximum(_bn_train(y, gB1[...], bB1[...], col, inv_m), 0.0)
    y = _conv3x3_concat(y, wB2, mask_ref, patch_ref, shifts)
    o_ref[...] = jnp.maximum(_bn_train(y, gB2[...], bB2[...], col, inv_m) + x2, 0.0)


def _head_kernel(x_ref, p_ref, w_ref, b_ref, o_ref):
    # Global average pool as a matmul with a (M, N) {0, 1/hw} pooling matrix (padded
    # columns excluded by construction), then the fc layer.
    pooled = jnp.dot(x_ref[...], p_ref[...], preferred_element_type=jnp.float32)
    o_ref[...] = jnp.dot(w_ref[...], pooled, preferred_element_type=jnp.float32) + b_ref[...]


# ------------------------- roll-direction calibration ----------------------- #

_ROLL_SIGN = None


def _roll_probe_kernel(x_ref, o_ref):
    o_ref[...] = pltpu.roll(x_ref[...], 1, axis=1)


def _roll_sign():
    """Calibrate pltpu.roll's direction once (eagerly) so the in-kernel conv taps are
    oriented exactly like jnp.roll, independent of the primitive's convention."""
    global _ROLL_SIGN
    if _ROLL_SIGN is None:
        x = jnp.tile(jnp.arange(LANE, dtype=jnp.float32)[None, :], (8, 1))
        y = pl.pallas_call(
            _roll_probe_kernel,
            out_shape=jax.ShapeDtypeStruct((8, LANE), jnp.float32),
            in_specs=[_VMEM()],
            out_specs=_VMEM(),
        )(x)
        matches_jnp = bool(y[0, 0] == float(LANE - 1))
        _ROLL_SIGN = -1 if matches_jnp else 1
    return _ROLL_SIGN


# ------------------------------- wrapper glue -------------------------------- #

_AUX_CACHE = {}


def _conv3x3_aux(n, oh, ow, m_pad):
    """Static per-tap lane-roll shifts and {0,1} bf16 validity masks for a 3x3/s1/p1
    window on a (C, n*oh*ow) activation padded to m_pad columns."""
    key = (n, oh, ow, m_pad)
    if key not in _AUX_CACHE:
        sign = _roll_sign()
        m_true = n * oh * ow
        r = np.arange(m_pad)
        ii = (r // ow) % oh
        jj = r % ow
        col_ok = r < m_true
        masks = np.zeros((9, 1, m_pad), np.float32)
        shifts = []
        for ky in range(3):
            for kx in range(3):
                k = ky * 3 + kx
                off = (ky - 1) * ow + (kx - 1)
                src_i = ii + (ky - 1)
                src_j = jj + (kx - 1)
                ok = col_ok & (src_i >= 0) & (src_i < oh) & (src_j >= 0) & (src_j < ow)
                masks[k, 0, :] = ok.astype(np.float32)
                shifts.append(int((sign * off) % m_pad))
        _AUX_CACHE[key] = (jnp.asarray(masks, dtype=jnp.bfloat16), tuple(shifts))
    return _AUX_CACHE[key]


def _pad_cols(x, m_pad):
    m = x.shape[-1]
    if m == m_pad:
        return x
    pad = [(0, 0)] * (x.ndim - 1) + [(0, m_pad - m)]
    return jnp.pad(x, pad)


def _im2col_t(x4, kh, kw, stride, pad):
    """x4: (C, N, H, W) -> A^T of shape (kh*kw*C, N*OH*OW), rows ordered (tap, cin)."""
    c, n, h, w = x4.shape
    xp = jnp.pad(x4, ((0, 0), (0, 0), (pad, pad), (pad, pad)))
    oh = (h + 2 * pad - kh) // stride + 1
    ow = (w + 2 * pad - kw) // stride + 1
    cols = []
    for ky in range(kh):
        for kx in range(kw):
            cols.append(xp[:, :, ky:ky + stride * oh:stride, kx:kx + stride * ow:stride])
    a = jnp.stack(cols, axis=0).reshape(kh * kw * c, n * oh * ow)
    return a, oh, ow


def _cost(flops, args, out_shape):
    nbytes = int(np.prod(out_shape.shape)) * jnp.dtype(out_shape.dtype).itemsize
    for a in args:
        nbytes += int(np.prod(a.shape)) * jnp.dtype(a.dtype).itemsize
    return pl.CostEstimate(flops=int(flops), transcendentals=0, bytes_accessed=int(nbytes))


# ------------------------------ network pieces ------------------------------- #

def stem_maxpool(x_nchw, p):
    """7x7/s2 conv + BN + ReLU + 3x3/s2 max-pool, one fused kernel (+ a cheap slice)."""
    n = x_nchw.shape[0]
    x4 = jnp.transpose(x_nchw, (1, 0, 2, 3)).astype(jnp.float32)   # (Cin, N, H, W)
    a, oh, ow = _im2col_t(x4, 7, 7, 2, 3)
    m_true = n * oh * ow
    m_pad = _round_up(m_true, LANE)
    a = _pad_cols(a, m_pad).astype(jnp.bfloat16)
    masks, shifts = _conv3x3_aux(n, oh, ow, m_pad)
    w, g, b = p['conv1_wT'], p['bn1_g'], p['bn1_b']
    cout = w.shape[0]
    args = (a, w, g, b, masks)
    out_shape = jax.ShapeDtypeStruct((cout, m_pad), jnp.float32)
    mp = pl.pallas_call(
        functools.partial(_stem_kernel, shifts=shifts, inv_m=1.0 / m_true),
        out_shape=out_shape,
        in_specs=[_VMEM() for _ in args],
        out_specs=_VMEM(),
        cost_estimate=_cost(2 * cout * a.shape[0] * m_true + 9 * cout * m_true, args, out_shape),
        compiler_params=_cparams(),
    )(*args)
    # Stride-2 column selection of the fused stride-1 max-pool result (cheap slice;
    # no 9x f32 HBM patch expansion).
    poh = (oh - 1) // 2 + 1
    pow_ = (ow - 1) // 2 + 1
    x4m = mp[:, :m_true].reshape(cout, n, oh, ow)[:, :, ::2, ::2]
    m_out = n * poh * pow_
    xT = _pad_cols(x4m.reshape(cout, m_out), _round_up(m_out, LANE))
    return xT, poh, pow_


def stage_s1(xT, blocks, n, oh, ow):
    """Stage 1: two stride-1 BasicBlocks fused into one kernel (in-kernel im2col)."""
    c, m_pad = xT.shape
    m_true = n * oh * ow
    masks, shifts = _conv3x3_aux(n, oh, ow, m_pad)
    bA, bB = blocks
    args = (xT, bA['w1'], bA['g1'], bA['b1'], bA['w2'], bA['g2'], bA['b2'],
            bB['w1'], bB['g1'], bB['b1'], bB['w2'], bB['g2'], bB['b2'], masks)
    out_shape = jax.ShapeDtypeStruct((c, m_pad), jnp.float32)
    flops = 2 * 4 * (9 * c * c) * m_true
    return pl.pallas_call(
        functools.partial(_stage_kernel, shifts=shifts, inv_m=1.0 / m_true),
        out_shape=out_shape,
        in_specs=[_VMEM() for _ in args],
        out_specs=_VMEM(),
        scratch_shapes=[pltpu.VMEM((9 * c, m_pad), jnp.bfloat16)],
        cost_estimate=_cost(flops, args, out_shape),
        compiler_params=_cparams(),
    )(*args)


def stage_down(xT, blocks, n, oh, ow):
    """Stages 2-4: stride-2 block (with 1x1 downsample) + stride-1 block, one kernel."""
    cin = xT.shape[0]
    m_in = n * oh * ow
    x4 = xT[:, :m_in].reshape(cin, n, oh, ow)
    a1, ooh, oow = _im2col_t(x4, 3, 3, 2, 1)
    m_out = n * ooh * oow
    m_pad = _round_up(m_out, LANE)
    a1 = _pad_cols(a1, m_pad).astype(jnp.bfloat16)
    ad = _pad_cols(x4[:, :, ::2, ::2].reshape(cin, m_out), m_pad).astype(jnp.bfloat16)
    masks, shifts = _conv3x3_aux(n, ooh, oow, m_pad)
    bA, bB = blocks
    cout = bA['w1'].shape[0]
    args = (a1, ad, bA['w1'], bA['g1'], bA['b1'], bA['w2'], bA['g2'], bA['b2'],
            bA['wd'], bA['gd'], bA['bd'],
            bB['w1'], bB['g1'], bB['b1'], bB['w2'], bB['g2'], bB['b2'], masks)
    out_shape = jax.ShapeDtypeStruct((cout, m_pad), jnp.float32)
    flops = 2 * m_out * (cout * 9 * cin + cout * cin + 3 * 9 * cout * cout)
    out = pl.pallas_call(
        functools.partial(_stage_down_kernel, shifts=shifts, inv_m=1.0 / m_out),
        out_shape=out_shape,
        in_specs=[_VMEM() for _ in args],
        out_specs=_VMEM(),
        scratch_shapes=[pltpu.VMEM((9 * cout, m_pad), jnp.bfloat16)],
        cost_estimate=_cost(flops, args, out_shape),
        compiler_params=_cparams(),
    )(*args)
    return out, ooh, oow


def avgpool_fc(xT, n, oh, ow, p):
    c, m_pad = xT.shape
    hw = oh * ow
    pool = np.zeros((m_pad, n), np.float32)
    for i in range(n):
        pool[i * hw:(i + 1) * hw, i] = 1.0 / hw
    pool = jnp.asarray(pool)
    w, bias = p['fc_wT'], p['fc_b']
    nc = w.shape[0]
    args = (xT, pool, w, bias)
    out_shape = jax.ShapeDtypeStruct((nc, n), jnp.float32)
    logits_t = pl.pallas_call(
        _head_kernel,
        out_shape=out_shape,
        in_specs=[_VMEM() for _ in args],
        out_specs=_VMEM(),
        cost_estimate=_cost(2 * c * m_pad * n + 2 * nc * c * n, args, out_shape),
        compiler_params=_cparams(),
    )(*args)
    return logits_t.T


# --------------------------------- parameters -------------------------------- #

def init_resnet18_params(key, num_classes=10):
    keys = iter(jax.random.split(key, 64))

    def conv_w(cout, cin, kh, kw):
        fan_in = cin * kh * kw
        std = math.sqrt(2.0 / fan_in)       # kaiming-normal (fan_in, relu) like torchvision
        return std * jax.random.normal(next(keys), (cout, cin, kh, kw), jnp.float32)

    def bn(c):
        return jnp.ones((c,), jnp.float32), jnp.zeros((c,), jnp.float32)

    params = {'conv1_w': conv_w(64, 3, 7, 7), 'bn1': bn(64)}
    stages = []
    in_c = 64
    for out_c, stride in ((64, 1), (128, 2), (256, 2), (512, 2)):
        blocks = []
        for bi in range(2):
            s = stride if bi == 0 else 1
            blk = {'conv1_w': conv_w(out_c, in_c, 3, 3), 'bn1': bn(out_c),
                   'conv2_w': conv_w(out_c, out_c, 3, 3), 'bn2': bn(out_c)}
            if s != 1 or in_c != out_c:
                blk['ds_w'] = conv_w(out_c, in_c, 1, 1)
                blk['ds_bn'] = bn(out_c)
            blocks.append(blk)
            in_c = out_c
        stages.append(blocks)
    params['stages'] = stages
    bound = 1.0 / math.sqrt(512)
    params['fc_w'] = jax.random.uniform(next(keys), (512, num_classes), jnp.float32, -bound, bound)
    params['fc_b'] = jax.random.uniform(next(keys), (num_classes,), jnp.float32, -bound, bound)
    return params


def prepare_params(params):
    """One-time conversion to kernel-ready layouts; all conv weights go to the
    (Cout, 9*Cin) wt_2d layout (matches both the in-kernel patch stacking and the
    JAX-side im2col row order) as bf16; BN params as (C, 1) f32 columns."""
    _roll_sign()   # calibrate the roll direction eagerly (outside any jit trace)

    def bn_cols(bn):
        g, b = bn
        return (g.reshape(-1, 1).astype(jnp.float32),
                b.reshape(-1, 1).astype(jnp.float32))

    def wt_2d(w):        # (Cout, Cin, KH, KW) -> (Cout, KH*KW*Cin) bf16, (tap, cin) cols
        return jnp.transpose(w, (0, 2, 3, 1)).reshape(w.shape[0], -1).astype(jnp.bfloat16)

    g1, b1 = bn_cols(params['bn1'])
    prep = {'conv1_wT': wt_2d(params['conv1_w']), 'bn1_g': g1, 'bn1_b': b1}
    stages = []
    for blocks in params['stages']:
        pblocks = []
        for blk in blocks:
            bg1, bb1 = bn_cols(blk['bn1'])
            bg2, bb2 = bn_cols(blk['bn2'])
            pb = {'w1': wt_2d(blk['conv1_w']), 'g1': bg1, 'b1': bb1,
                  'w2': wt_2d(blk['conv2_w']), 'g2': bg2, 'b2': bb2}
            if 'ds_w' in blk:
                pb['wd'] = blk['ds_w'].reshape(blk['ds_w'].shape[0], -1).astype(jnp.bfloat16)
                gd, bd = bn_cols(blk['ds_bn'])
                pb['gd'], pb['bd'] = gd, bd
            pblocks.append(pb)
        stages.append(pblocks)
    prep['stages'] = stages
    prep['fc_wT'] = params['fc_w'].T.astype(jnp.float32)
    prep['fc_b'] = params['fc_b'].reshape(-1, 1).astype(jnp.float32)
    return prep


def resnet18_forward(x_nchw, prep):
    n = x_nchw.shape[0]
    xT, oh, ow = stem_maxpool(x_nchw, prep)
    for blocks in prep['stages']:
        if 'wd' in blocks[0]:
            xT, oh, ow = stage_down(xT, blocks, n, oh, ow)
        else:
            xT = stage_s1(xT, blocks, n, oh, ow)
    return avgpool_fc(xT, n, oh, ow, prep)


if __name__ == "__main__":
    key = jax.random.PRNGKey(0)
    k_params, k_input = jax.random.split(key)
    params = prepare_params(init_resnet18_params(k_params, num_classes=10))
    x = jax.random.normal(k_input, (2, 3, 32, 32), jnp.float32)   # NCHW, like PyTorch

    _roll_sign()   # safety: calibration must happen eagerly before jit tracing
    fwd = jax.jit(resnet18_forward)
    logits = jax.block_until_ready(fwd(x, params))
    assert logits.shape == (2, 10), logits.shape
    assert bool(jnp.all(jnp.isfinite(logits)))
    print("KERNEL_OK")
</pallas_src>

<mosaic_0001>
module attributes {stable_mosaic.version = 11 : i64} {
  func.func @_roll_probe_kernel(%arg0: memref<8x128xf32, #tpu.memory_space<vmem>>, %arg1: memref<8x128xf32, #tpu.memory_space<vmem>>) attributes {dimension_semantics = [], scalar_prefetch = 0 : i64, scratch_operands = 0 : i64, tpu.core_type = #tpu.core_type<tc>} {
    %c0 = arith.constant 0 : index
    %c0_0 = arith.constant 0 : index
    %0 = vector.load %arg0[%c0, %c0_0] : memref<8x128xf32, #tpu.memory_space<vmem>>, vector<8x128xf32>
    %c1_i32 = arith.constant 1 : i32
    %1 = tpu.dynamic_rotate %0 by %c1_i32 dim 1 : vector<8x128xf32>, i32 -> vector<8x128xf32>
    %c0_1 = arith.constant 0 : index
    %c0_2 = arith.constant 0 : index
    %2 = vector.load %arg1[%c0_1, %c0_2] : memref<8x128xf32, #tpu.memory_space<vmem>>, vector<8x128xf32>
    tpu.vector_store %arg1[%c0_1, %c0_2], %1 {strides = array<i32>} : memref<8x128xf32, #tpu.memory_space<vmem>>, vector<8x128xf32>,
    return
  }
}

</mosaic_0001>

<llo_original>
// kernel: tpu_custom_call.1
$region0: #{tpu_custom_call.1}
  #allocation0 [shape = 'u32[]', space=smem, size = 0x4, offset = 0x4, fixed_abs, tag = 'smem constant byte address 0x4 - core index']
  #allocation1 [shape = 'u32[144,128]{1,0:T(1,128)}', space=vmem, size = 0x12000, scoped, tag = 'internal scratch']
  %s0 = inlined_call_operand.hbm [shape: f32[8,128], index: 0, kind: input, shape index: {}]
  %s1 = inlined_call_operand.hbm [shape: f32[8,128], index: 1, kind: output, shape index: {}]
  %s2 = sld [smem:[#allocation0]]
  $region18: #{tpu_custom_call.1} parent=0
    _
  %s4 = ssub.s32 1, %s2
  %s5 = scalar_select 0, %s4, %s2
  $region1: #{tpu_custom_call.1} parent=0
    #allocation2 [shape = 'u8[4096]{0}', space=vmem, size = 0x1000, scoped, tag = 'input window, operand 0, single buffered']
    #allocation3 [shape = 's32[1]{0}', space=sflag, size = 0x4, scoped, tag = 'scoped memory for tpu_custom_call.1']
    #allocation4 [shape = 's32[1]{0}', space=sflag, size = 0x4, scoped, tag = 'scoped memory for tpu_custom_call.1']
    #allocation5 [shape = 'u8[4096]{0}', space=vmem, size = 0x1000, scoped, tag = 'output window, operand 0, single buffered']
    %6 = vsyncpa [#allocation3], 0
    %7 = vsyncpa [#allocation4], 0
    // Predicated region
    $region2: #{tpu_custom_call.1} parent=1 // pred_check
      _
    $region3: #{tpu_custom_call.1} parent=1 // pred_check_branch
      %9 = sbr.rel (0) target = $region5
    $region4: #{tpu_custom_call.1} parent=1 // pred_region
      %s11 = ssub.s32 128, 128
      %12 = vsyncadd [#allocation3], %s11
      %s14 = sshll.u32 [#allocation2], 4
      %s15 = int_to_ptr.vmem [resolvable:$true] %s14
      %17 = dma.hbm_to_vmem [thread:$0]  %s0, 128, %s15, [#allocation3]
    $region5: #{tpu_custom_call.1} parent=1 // pred_fallthru
      _
    // Predicated region
    $region6: #{tpu_custom_call.1} parent=1 // pred_check
      _
    $region7: #{tpu_custom_call.1} parent=1 // pred_check_branch
      %19 = sbr.rel (0) target = $region9
    $region8: #{tpu_custom_call.1} parent=1 // pred_region
      %20 = dma.done [#allocation3], 128
    $region9: #{tpu_custom_call.1} parent=1 // pred_fallthru
      _
    %v21 = vld [vmem:[#allocation2] sm:$0xff]
    %22 = vrot.lane.b32.xlu0 %v21, 1
    %v23 = vpop.permute.xlu0 %22
    %24 = vst [vmem:[#allocation5] sm:$0xff] %v23
    // Predicated region
    $region10: #{tpu_custom_call.1} parent=1 // pred_check
      _
    $region11: #{tpu_custom_call.1} parent=1 // pred_check_branch
      %26 = sbr.rel (0) target = $region13
    $region12: #{tpu_custom_call.1} parent=1 // pred_region
      %s28 = ssub.s32 128, 128
      %29 = vsyncadd [#allocation4], %s28
      %s31 = sshll.u32 [#allocation5], 4
      %s32 = int_to_ptr.vmem [resolvable:$true] %s31
      %34 = dma.vmem_to_hbm [thread:$0]  %s32, 128, %s1, [#allocation4]
    $region13: #{tpu_custom_call.1} parent=1 // pred_fallthru
      _
    // Predicated region
    $region14: #{tpu_custom_call.1} parent=1 // pred_check
      _
    $region15: #{tpu_custom_call.1} parent=1 // pred_check_branch
      %36 = sbr.rel (0) target = $region17
    $region16: #{tpu_custom_call.1} parent=1 // pred_region
      %37 = dma.done [#allocation4], 128
    $region17: #{tpu_custom_call.1} parent=1 // pred_fallthru
      _
    %38 = vsyncpa [#allocation3], 1
    %39 = vsyncpa [#allocation4], 1

</llo_original>
